<compile_context>
chip_gen: v6e
topology: v6e:2x2x1
jax: 0.10.0
libtpu: 0.0.40
codegen_flags: <defaults>
</compile_context>

<pallas_src>
import math

import jax
import jax.numpy as jnp
from jax import lax
from jax.experimental import pallas as pl
from jax.experimental.pallas import tpu as pltpu


def _cheb_kernel(lcat_ref, xcat_ref, wbd_ref, acc_ref):
    """grid = (row_blocks,). The Chebyshev-order loop is unrolled in-kernel.

    lcat_ref : (K+1, row_tile, N)  bf16   [L_real ; L_imag] row-stacked
    xcat_ref : (N, 2*B*C)          bf16   [xr_b | xi_b] lane-stacked over b
    wbd_ref  : (K+1, 2BC, 2BF)     f32    block-diag(W[k]) (resident)
    acc_ref  : (row_tile, 2BF)     f32    output accumulator
    """
    kp1 = lcat_ref.shape[0]
    x = xcat_ref[...]                                    # (N, 2BC), bf16

    def body(k, acc):
        # stage 1: [L_r; L_i][k] @ [xr | xi]  — bf16 MXU, f32 accumulation
        m = jnp.dot(lcat_ref[k], x, preferred_element_type=jnp.float32)
        # stage 2: block-diagonal weight applies W[k] to every (b, re/im)
        # column group in a single matmul.
        return acc + jnp.dot(m, wbd_ref[k], preferred_element_type=jnp.float32)

    acc_ref[...] = lax.fori_loop(
        0, kp1, body, jnp.zeros(acc_ref.shape, jnp.float32), unroll=True)


def _pick_row_tile(two_n):
    # Full rows for small graphs; ~512-row tiles for large ones (keeps the
    # double-buffered L block well inside v7x's 64 MiB VMEM).
    if two_n <= 1024:
        return two_n
    for t in (512, 256, 128):
        if two_n % t == 0:
            return t
    return two_n


def cheb_conv_forward(X_real, X_imag, L_real, L_imag, weight):
    B, N, C = X_real.shape
    Kp1, _, F = weight.shape
    assert L_real.shape == (Kp1, N, N) and L_imag.shape == (Kp1, N, N)

    two_n = 2 * N
    two_bc = 2 * B * C
    two_bf = 2 * B * F

    # ---- wrapper-side layout plumbing (done once, cheap) --------------------
    # Rows 0:N = L_real, rows N:2N = L_imag; bf16 feeds the MXU natively.
    Lcat = jnp.concatenate([L_real, L_imag], axis=1).astype(jnp.bfloat16)
    # Xcat column index = b*2C + p*C + c, p in {0: real, 1: imag}.
    Xcat = jnp.transpose(jnp.stack([X_real, X_imag], axis=2), (1, 0, 2, 3))
    Xcat = Xcat.reshape(N, two_bc).astype(jnp.bfloat16)
    # Block-diagonal weight: W[k] on each of the 2B diagonal (C, F) blocks.
    # TODO(synk): for very large B*C (> ~128 contraction) switch stage 2 to a
    # sublane-stacked (4BN, C) @ (C, F) matmul to avoid the zero-block MACs.
    eye = jnp.eye(2 * B, dtype=weight.dtype)
    Wbd = jnp.einsum('kcf,ij->kicjf', weight, eye).reshape(Kp1, two_bc, two_bf)

    row_tile = _pick_row_tile(two_n)
    grid = (two_n // row_tile,)

    # ---- VMEM budget + cost hint --------------------------------------------
    footprint = 2 * (Kp1 * row_tile * N * 2        # Lcat block (double-buffered)
                     + N * two_bc * 2              # Xcat
                     + Kp1 * two_bc * two_bf * 4   # Wbd (resident)
                     + row_tile * two_bf * 4)      # output block
    vmem_limit = int(min(64 * 1024 * 1024, max(16 * 1024 * 1024, 2 * footprint)))
    flops = 2 * Kp1 * (two_n * N * two_bc + two_n * two_bc * two_bf)
    bytes_accessed = int(Lcat.size * 2 + Xcat.size * 2 + Wbd.size * 4
                         + two_n * two_bf * 4)

    acc = pl.pallas_call(
        _cheb_kernel,
        grid=grid,
        in_specs=[
            pl.BlockSpec((Kp1, row_tile, N), lambda r: (0, r, 0)),     # Lcat
            pl.BlockSpec((N, two_bc), lambda r: (0, 0)),               # Xcat
            pl.BlockSpec((Kp1, two_bc, two_bf), lambda r: (0, 0, 0)),  # Wbd
        ],
        out_specs=pl.BlockSpec((row_tile, two_bf), lambda r: (r, 0)),
        out_shape=jax.ShapeDtypeStruct((two_n, two_bf), jnp.float32),
        compiler_params=pltpu.CompilerParams(
            dimension_semantics=("parallel",),
            vmem_limit_bytes=vmem_limit),
        cost_estimate=pl.CostEstimate(
            flops=flops, transcendentals=0, bytes_accessed=bytes_accessed),
    )(Lcat, Xcat, Wbd)

    # ---- decode the fused accumulator into the four Chebyshev sums ----------
    acc_r = acc[:N].reshape(N, B, 2, F)     # L_real chains
    acc_i = acc[N:].reshape(N, B, 2, F)     # L_imag chains
    real = jnp.transpose(acc_r[:, :, 0, :], (1, 0, 2))    # sum_k (L_r@xr)@W_k
    imag_ = jnp.transpose(acc_r[:, :, 1, :], (1, 0, 2))   # sum_k (L_r@xi)@W_k
    imag = jnp.transpose(acc_i[:, :, 0, :], (1, 0, 2))    # sum_k (L_i@xr)@W_k
    real_ = -jnp.transpose(acc_i[:, :, 1, :], (1, 0, 2))  # sum_k (-L_i@xi)@W_k

    # Module return value: X + X*1j (pure elementwise; stays f32 in wrapper).
    out = (X_real - X_imag) + 1j * (X_real + X_imag)
    return out, (real, real_, imag, imag_)


def ref_forward(X_real, X_imag, L_real, L_imag, weight):
    """Pure-JAX f32 reference mirroring the PyTorch forward (incl. dead code)."""
    hp = jax.lax.Precision.HIGHEST

    def chain(L, X):
        lx = jnp.einsum('knm,bmc->kbnc', L, X, precision=hp)
        return jnp.einsum('kbnc,kcf->bnf', lx, weight, precision=hp)

    real = chain(L_real, X_real)
    real_ = chain(-L_imag, X_imag)
    imag = chain(L_imag, X_real)
    imag_ = chain(L_real, X_imag)
    out = (X_real - X_imag) + 1j * (X_real + X_imag)   # == X + X*1j
    return out, (real, real_, imag, imag_)


if __name__ == "__main__":
    B, N, C, F, K = 2, 16, 4, 8, 3   # batch, nodes, in_features, out_features, order
    key = jax.random.PRNGKey(0)
    k1, k2, k3, k4, k5 = jax.random.split(key, 5)

    X_real = jax.random.normal(k1, (B, N, C), jnp.float32)
    X_imag = jax.random.normal(k2, (B, N, C), jnp.float32)
    L_real = jax.random.normal(k3, (K + 1, N, N), jnp.float32) / N
    L_imag = jax.random.normal(k4, (K + 1, N, N), jnp.float32) / N

    stdv = 1.0 / math.sqrt(F)
    weight = jax.random.uniform(k5, (K + 1, C, F), jnp.float32, -stdv, stdv)
    bias = jnp.zeros((1, 1, F), jnp.float32)  # defined in __init__, unused in forward

    out, cheb = cheb_conv_forward(X_real, X_imag, L_real, L_imag, weight)
    out = jax.block_until_ready(out)
    cheb = jax.block_until_ready(cheb)

    ref_out, ref_cheb = ref_forward(X_real, X_imag, L_real, L_imag, weight)

    # Primary (returned) value: X + X*1j -- elementwise f32, must match tightly.
    assert jnp.allclose(out, ref_out, atol=1e-6, rtol=1e-6), "main output mismatch"
    # Intermediate Chebyshev sums (computed but discarded by the module).
    # L/X are fed to the kernel as bf16 (per the perf review), so compare to the
    # f32 reference with a bf16-appropriate tolerance.
    for got, want in zip(cheb, ref_cheb):
        assert jnp.allclose(got, want, atol=1e-2, rtol=1e-2), "chebyshev sum mismatch"

    print("KERNEL_OK")
</pallas_src>

<mosaic_0001>
module attributes {stable_mosaic.version = 11 : i64} {
  func.func @_cheb_kernel(%arg0: i32, %arg1: memref<4x32x16xbf16, #tpu.memory_space<vmem>>, %arg2: memref<16x16xbf16, #tpu.memory_space<vmem>>, %arg3: memref<4x16x32xf32, #tpu.memory_space<vmem>>, %arg4: memref<32x32xf32, #tpu.memory_space<vmem>>) attributes {dimension_semantics = [#tpu.dimension_semantics<parallel>], iteration_bounds = array<i64: 1>, scalar_prefetch = 0 : i64, scratch_operands = 0 : i64, tpu.core_type = #tpu.core_type<tc>, window_params = [{transform_indices = @transform_0, window_bounds = array<i64: 4, 32, 16>}, {pipeline_mode = #tpu.pipeline_mode<synchronous>, transform_indices = @transform_1, window_bounds = array<i64: 16, 16>}, {pipeline_mode = #tpu.pipeline_mode<synchronous>, transform_indices = @transform_2, window_bounds = array<i64: 4, 16, 32>}, {transform_indices = @transform_3, window_bounds = array<i64: 32, 32>}]} {
    %c0 = arith.constant 0 : index
    %c0_0 = arith.constant 0 : index
    %0 = vector.load %arg2[%c0, %c0_0] : memref<16x16xbf16, #tpu.memory_space<vmem>>, vector<16x16xbf16>
    %cst = arith.constant 0.000000e+00 : f32
    %1 = vector.broadcast %cst : f32 to vector<32x32xf32>
    %c0_i32 = arith.constant 0 : i32
    %2 = arith.index_cast %c0_i32 : i32 to index
    %c0_1 = arith.constant 0 : index
    %c0_2 = arith.constant 0 : index
    %3 = vector.load %arg1[%2, %c0_1, %c0_2] : memref<4x32x16xbf16, #tpu.memory_space<vmem>>, vector<1x32x16xbf16>
    %4 = vector.shape_cast %3 : vector<1x32x16xbf16> to vector<32x16xbf16>
    %cst_3 = arith.constant dense<0.000000e+00> : vector<32x16xf32>
    %5 = tpu.matmul %4, %0, %cst_3 {dimension_numbers = #tpu.dot_dimension_numbers<[1], [0], [0], [1], [0, 0, 1, 1], [], []>} : vector<32x16xbf16>, vector<16x16xbf16>, vector<32x16xf32> -> vector<32x16xf32>
    %6 = arith.index_cast %c0_i32 : i32 to index
    %c0_4 = arith.constant 0 : index
    %c0_5 = arith.constant 0 : index
    %7 = vector.load %arg3[%6, %c0_4, %c0_5] : memref<4x16x32xf32, #tpu.memory_space<vmem>>, vector<1x16x32xf32>
    %8 = vector.shape_cast %7 : vector<1x16x32xf32> to vector<16x32xf32>
    %cst_6 = arith.constant dense<0.000000e+00> : vector<32x32xf32>
    %9 = tpu.matmul %5, %8, %cst_6 {dimension_numbers = #tpu.dot_dimension_numbers<[1], [0], [0], [1], [0, 0, 1, 1], [], []>} : vector<32x16xf32>, vector<16x32xf32>, vector<32x32xf32> -> vector<32x32xf32>
    %10 = arith.addf %1, %9 : vector<32x32xf32>
    %c1_i32 = arith.constant 1 : i32
    %11 = arith.index_cast %c1_i32 : i32 to index
    %c0_7 = arith.constant 0 : index
    %c0_8 = arith.constant 0 : index
    %12 = vector.load %arg1[%11, %c0_7, %c0_8] : memref<4x32x16xbf16, #tpu.memory_space<vmem>>, vector<1x32x16xbf16>
    %13 = vector.shape_cast %12 : vector<1x32x16xbf16> to vector<32x16xbf16>
    %cst_9 = arith.constant dense<0.000000e+00> : vector<32x16xf32>
    %14 = tpu.matmul %13, %0, %cst_9 {dimension_numbers = #tpu.dot_dimension_numbers<[1], [0], [0], [1], [0, 0, 1, 1], [], []>} : vector<32x16xbf16>, vector<16x16xbf16>, vector<32x16xf32> -> vector<32x16xf32>
    %15 = arith.index_cast %c1_i32 : i32 to index
    %c0_10 = arith.constant 0 : index
    %c0_11 = arith.constant 0 : index
    %16 = vector.load %arg3[%15, %c0_10, %c0_11] : memref<4x16x32xf32, #tpu.memory_space<vmem>>, vector<1x16x32xf32>
    %17 = vector.shape_cast %16 : vector<1x16x32xf32> to vector<16x32xf32>
    %cst_12 = arith.constant dense<0.000000e+00> : vector<32x32xf32>
    %18 = tpu.matmul %14, %17, %cst_12 {dimension_numbers = #tpu.dot_dimension_numbers<[1], [0], [0], [1], [0, 0, 1, 1], [], []>} : vector<32x16xf32>, vector<16x32xf32>, vector<32x32xf32> -> vector<32x32xf32>
    %19 = arith.addf %10, %18 : vector<32x32xf32>
    %c2_i32 = arith.constant 2 : i32
    %20 = arith.index_cast %c2_i32 : i32 to index
    %c0_13 = arith.constant 0 : index
    %c0_14 = arith.constant 0 : index
    %21 = vector.load %arg1[%20, %c0_13, %c0_14] : memref<4x32x16xbf16, #tpu.memory_space<vmem>>, vector<1x32x16xbf16>
    %22 = vector.shape_cast %21 : vector<1x32x16xbf16> to vector<32x16xbf16>
    %cst_15 = arith.constant dense<0.000000e+00> : vector<32x16xf32>
    %23 = tpu.matmul %22, %0, %cst_15 {dimension_numbers = #tpu.dot_dimension_numbers<[1], [0], [0], [1], [0, 0, 1, 1], [], []>} : vector<32x16xbf16>, vector<16x16xbf16>, vector<32x16xf32> -> vector<32x16xf32>
    %24 = arith.index_cast %c2_i32 : i32 to index
    %c0_16 = arith.constant 0 : index
    %c0_17 = arith.constant 0 : index
    %25 = vector.load %arg3[%24, %c0_16, %c0_17] : memref<4x16x32xf32, #tpu.memory_space<vmem>>, vector<1x16x32xf32>
    %26 = vector.shape_cast %25 : vector<1x16x32xf32> to vector<16x32xf32>
    %cst_18 = arith.constant dense<0.000000e+00> : vector<32x32xf32>
    %27 = tpu.matmul %23, %26, %cst_18 {dimension_numbers = #tpu.dot_dimension_numbers<[1], [0], [0], [1], [0, 0, 1, 1], [], []>} : vector<32x16xf32>, vector<16x32xf32>, vector<32x32xf32> -> vector<32x32xf32>
    %28 = arith.addf %19, %27 : vector<32x32xf32>
    %c3_i32 = arith.constant 3 : i32
    %29 = arith.index_cast %c3_i32 : i32 to index
    %c0_19 = arith.constant 0 : index
    %c0_20 = arith.constant 0 : index
    %30 = vector.load %arg1[%29, %c0_19, %c0_20] : memref<4x32x16xbf16, #tpu.memory_space<vmem>>, vector<1x32x16xbf16>
    %31 = vector.shape_cast %30 : vector<1x32x16xbf16> to vector<32x16xbf16>
    %cst_21 = arith.constant dense<0.000000e+00> : vector<32x16xf32>
    %32 = tpu.matmul %31, %0, %cst_21 {dimension_numbers = #tpu.dot_dimension_numbers<[1], [0], [0], [1], [0, 0, 1, 1], [], []>} : vector<32x16xbf16>, vector<16x16xbf16>, vector<32x16xf32> -> vector<32x16xf32>
    %33 = arith.index_cast %c3_i32 : i32 to index
    %c0_22 = arith.constant 0 : index
    %c0_23 = arith.constant 0 : index
    %34 = vector.load %arg3[%33, %c0_22, %c0_23] : memref<4x16x32xf32, #tpu.memory_space<vmem>>, vector<1x16x32xf32>
    %35 = vector.shape_cast %34 : vector<1x16x32xf32> to vector<16x32xf32>
    %cst_24 = arith.constant dense<0.000000e+00> : vector<32x32xf32>
    %36 = tpu.matmul %32, %35, %cst_24 {dimension_numbers = #tpu.dot_dimension_numbers<[1], [0], [0], [1], [0, 0, 1, 1], [], []>} : vector<32x16xf32>, vector<16x32xf32>, vector<32x32xf32> -> vector<32x32xf32>
    %37 = arith.addf %28, %36 : vector<32x32xf32>
    %c4_i32 = arith.constant 4 : i32
    %c0_25 = arith.constant 0 : index
    %c0_26 = arith.constant 0 : index
    %38 = vector.load %arg4[%c0_25, %c0_26] : memref<32x32xf32, #tpu.memory_space<vmem>>, vector<32x32xf32>
    tpu.vector_store %arg4[%c0_25, %c0_26], %37 {strides = array<i32>} : memref<32x32xf32, #tpu.memory_space<vmem>>, vector<32x32xf32>,
    return
  }
  func.func @transform_0(%arg0: i32) -> (i32, i32, i32) {
    %c0_i32 = arith.constant 0 : i32
    %c0_i32_0 = arith.constant 0 : i32
    %c0_i32_1 = arith.constant 0 : i32
    return %c0_i32, %arg0, %c0_i32_0 : i32, i32, i32
  }
  func.func @transform_1(%arg0: i32) -> (i32, i32) {
    %c0_i32 = arith.constant 0 : i32
    %c0_i32_0 = arith.constant 0 : i32
    %c0_i32_1 = arith.constant 0 : i32
    return %c0_i32, %c0_i32_0 : i32, i32
  }
  func.func @transform_2(%arg0: i32) -> (i32, i32, i32) {
    %c0_i32 = arith.constant 0 : i32
    %c0_i32_0 = arith.constant 0 : i32
    %c0_i32_1 = arith.constant 0 : i32
    %c0_i32_2 = arith.constant 0 : i32
    return %c0_i32, %c0_i32_0, %c0_i32_1 : i32, i32, i32
  }
  func.func @transform_3(%arg0: i32) -> (i32, i32) {
    %c0_i32 = arith.constant 0 : i32
    %c0_i32_0 = arith.constant 0 : i32
    return %arg0, %c0_i32 : i32, i32
  }
}

</mosaic_0001>

<llo_original>
// kernel: tpu_custom_call.1
$region0: #{tpu_custom_call.1}
  #allocation0 [shape = 'u32[]', space=smem, size = 0x4, offset = 0x4, fixed_abs, tag = 'smem constant byte address 0x4 - core index']
  #allocation1 [shape = 'u32[144,128]{1,0:T(1,128)}', space=vmem, size = 0x12000, scoped, tag = 'internal scratch']
  %s0 = inlined_call_operand.vmem [shape: bf16[4,32,16], index: 0, kind: input, shape index: {}]
  %s1 = inlined_call_operand.vmem [shape: bf16[16,16], index: 1, kind: input, shape index: {}]
  %s2 = inlined_call_operand.vmem [shape: f32[4,16,32], index: 2, kind: input, shape index: {}]
  %s3 = inlined_call_operand.hbm [shape: f32[32,32], index: 3, kind: output, shape index: {}]
  %s4 = sld [smem:[#allocation0]]
  $region22: #{tpu_custom_call.1} parent=0
    _
  %s6 = ssub.s32 1, %s4
  %s7 = scalar_select 0, %s6, %s4
  $region1: #{tpu_custom_call.1} parent=0
    #allocation2 [shape = 'u8[16384]{0}', space=vmem, size = 0x4000, scoped, tag = 'output window, operand 0, single buffered']
    #allocation3 [shape = 's32[1]{0}', space=sflag, size = 0x4, scoped, tag = 'scoped memory for tpu_custom_call.1']
    %8 = vsyncpa [#allocation3], 0
    // Predicated region
    $region2: #{tpu_custom_call.1} parent=1 // pred_check
      _
    $region3: #{tpu_custom_call.1} parent=1 // pred_check_branch
      %10 = sbr.rel (0) target = $region5
    $region4: #{tpu_custom_call.1} parent=1 // pred_region
      _
    $region5: #{tpu_custom_call.1} parent=1 // pred_fallthru
      _
    // Predicated region
    $region6: #{tpu_custom_call.1} parent=1 // pred_check
      _
    $region7: #{tpu_custom_call.1} parent=1 // pred_check_branch
      %12 = sbr.rel (0) target = $region9
    $region8: #{tpu_custom_call.1} parent=1 // pred_region
      _
    $region9: #{tpu_custom_call.1} parent=1 // pred_fallthru
      _
    // Predicated region
    $region10: #{tpu_custom_call.1} parent=1 // pred_check
      _
    $region11: #{tpu_custom_call.1} parent=1 // pred_check_branch
      %14 = sbr.rel (0) target = $region13
    $region12: #{tpu_custom_call.1} parent=1 // pred_region
      _
    $region13: #{tpu_custom_call.1} parent=1 // pred_fallthru
      _
    %v16 = vld [vmem:[%s1] sm:$0xf]
    %v17 = vld [vmem:[%s1 + $0x4] sm:$0xf]
    %v18 = vld [vmem:[%s0] sm:$0xf]
    %v19 = vld [vmem:[%s0 + $0x4] sm:$0xf]
    %v20 = vld [vmem:[%s0 + $0x8] sm:$0xf]
    %v21 = vld [vmem:[%s0 + $0xc] sm:$0xf]
    %v26 = vunpack.c.l.b16 %v18
    %v27 = vunpack.c.l.b16 %v19
    %v28 = vunpack.c.l.b16 %v20
    %v29 = vunpack.c.l.b16 %v21
    %v30 = vpack.c.b16 %v27, %v26
    %v31 = vpack.c.b16 %v29, %v28
    %v34 = vunpack.c.l.b16 %v16
    %v35 = vunpack.c.l.b16 %v17
    %v36 = vpack.c.b16 %v35, %v34
    %vm38 = vcmask 130048
    %v40 = vsel %vm38, %v30, 0
    %v43 = vsel %vm38, %v31, 0
    %45 = vmatprep.subr.bf16.mxu0 0
    %46 = vmatpush1.bf16.msra.mxu0 0
    %47 = vmatprep.subr.bf16.mxu0 0
    %48 = vmatpush1.bf16.msra.mxu0 0
    %49 = vmatprep.subr.bf16.mxu0 0
    %50 = vmatpush1.bf16.msra.mxu0 0
    %51 = vmatprep.subr.bf16.mxu0 0
    %52 = vmatpush1.bf16.msra.mxu0 0
    %53 = vmatprep.subr.bf16.mxu0 0
    %54 = vmatpush1.bf16.msra.mxu0 0
    %55 = vmatprep.subr.bf16.mxu0 0
    %56 = vmatpush1.bf16.msra.mxu0 0
    %57 = vmatprep.subr.bf16.mxu0 0
    %58 = vmatpush1.bf16.msra.mxu0 0
    %59 = vmatprep.subr.bf16.mxu0 0
    %60 = vmatpush1.bf16.msra.mxu0 %v36
    %61 = vmatprep.subr.bf16.mxu0 0
    %62 = vmatpush2.bf16.msra.mxu0 0
    %63 = vmatprep.subr.bf16.mxu0 0
    %64 = vmatpush2.bf16.msra.mxu0 0
    %65 = vmatprep.subr.bf16.mxu0 0
    %66 = vmatpush2.bf16.msra.mxu0 0
    %67 = vmatprep.subr.bf16.mxu0 0
    %68 = vmatpush2.bf16.msra.mxu0 0
    %69 = vmatprep.subr.bf16.mxu0 0
    %70 = vmatpush2.bf16.msra.mxu0 0
    %71 = vmatprep.subr.bf16.mxu0 0
    %72 = vmatpush2.bf16.msra.mxu0 0
    %73 = vmatprep.subr.bf16.mxu0 0
    %74 = vmatpush2.bf16.msra.mxu0 0
    %75 = vmatprep.subr.bf16.mxu0 0
    %76 = vmatpush2.bf16.msra.mxu0 0
    %77 = vmatprep.mubr.bf16.mxu0 0
    %78 = vmatmul.mubr.bf16.gmra.mxu0 %v40
    %v79 = vpop.f32.mrf.mxu0
    %v80 = vadd.f32 0.0, %v79
    %v81 = vpop.f32.mrf.mxu0
    %v82 = vpop.f32.mrf.mxu0
    %v83 = vadd.f32 0.0, %v82
    %v84 = vpop.f32.mrf.mxu0
    %85 = vmatprep.mubr.bf16.mxu0 0
    %86 = vmatmul.mubr.bf16.gmra.mxu0 %v43
    %v87 = vpop.f32.mrf.mxu0
    %v88 = vadd.f32 0.0, %v87
    %v89 = vpop.f32.mrf.mxu0
    %v90 = vpop.f32.mrf.mxu0
    %v91 = vadd.f32 0.0, %v90
    %v92 = vpop.f32.mrf.mxu0
    %93 = vdwg.mxu0
    %v94 = vld [vmem:[%s2] sm:$0xff]
    %v95 = vld [vmem:[%s2 + $0x8] sm:$0xff]
    %s96 = scalar_lea.vmem %s0, 16
    %v97 = vld [vmem:[%s96] sm:$0xf]
    %v98 = vld [vmem:[%s96 + $0x4] sm:$0xf]
    %v99 = vld [vmem:[%s96 + $0x8] sm:$0xf]
    %v100 = vld [vmem:[%s96 + $0xc] sm:$0xf]
    %v105 = vunpack.c.l.b16 %v97
    %v106 = vunpack.c.l.b16 %v98
    %v107 = vunpack.c.l.b16 %v99
    %v108 = vunpack.c.l.b16 %v100
    %v109 = vpack.c.b16 %v106, %v105
    %v110 = vpack.c.b16 %v108, %v107
    %v112 = vsel %vm38, %v109, 0
    %v115 = vsel %vm38, %v110, 0
    %117 = vmatprep.subr.bf16.mxu0 0
    %118 = vmatpush1.bf16.msra.mxu0 0
    %119 = vmatprep.subr.bf16.mxu0 0
    %120 = vmatpush1.bf16.msra.mxu0 0
    %121 = vmatprep.subr.bf16.mxu0 0
    %122 = vmatpush1.bf16.msra.mxu0 0
    %123 = vmatprep.subr.bf16.mxu0 0
    %124 = vmatpush1.bf16.msra.mxu0 0
    %125 = vmatprep.subr.bf16.mxu0 0
    %126 = vmatpush1.bf16.msra.mxu0 0
    %127 = vmatprep.subr.bf16.mxu0 0
    %128 = vmatpush1.bf16.msra.mxu0 0
    %129 = vmatprep.subr.bf16.mxu0 0
    %130 = vmatpush1.bf16.msra.mxu0 0
    %131 = vmatprep.subr.bf16.mxu0 0
    %132 = vmatpush1.bf16.msra.mxu0 %v36
    %133 = vmatprep.subr.bf16.mxu0 0
    %134 = vmatpush2.bf16.msra.mxu0 0
    %135 = vmatprep.subr.bf16.mxu0 0
    %136 = vmatpush2.bf16.msra.mxu0 0
    %137 = vmatprep.subr.bf16.mxu0 0
    %138 = vmatpush2.bf16.msra.mxu0 0
    %139 = vmatprep.subr.bf16.mxu0 0
    %140 = vmatpush2.bf16.msra.mxu0 0
    %141 = vmatprep.subr.bf16.mxu0 0
    %142 = vmatpush2.bf16.msra.mxu0 0
    %143 = vmatprep.subr.bf16.mxu0 0
    %144 = vmatpush2.bf16.msra.mxu0 0
    %145 = vmatprep.subr.bf16.mxu0 0
    %146 = vmatpush2.bf16.msra.mxu0 0
    %147 = vmatprep.subr.bf16.mxu0 0
    %148 = vmatpush2.bf16.msra.mxu0 0
    %149 = vmatprep.mubr.bf16.mxu0 0
    %150 = vmatmul.mubr.bf16.gmra.mxu0 %v112
    %v151 = vpop.f32.mrf.mxu0
    %v152 = vadd.f32 0.0, %v151
    %v153 = vpop.f32.mrf.mxu0
    %v154 = vpop.f32.mrf.mxu0
    %v155 = vadd.f32 0.0, %v154
    %v156 = vpop.f32.mrf.mxu0
    %157 = vmatprep.mubr.bf16.mxu0 0
    %158 = vmatmul.mubr.bf16.gmra.mxu0 %v115
    %v159 = vpop.f32.mrf.mxu0
    %v160 = vadd.f32 0.0, %v159
    %v161 = vpop.f32.mrf.mxu0
    %v162 = vpop.f32.mrf.mxu0
    %v163 = vadd.f32 0.0, %v162
    %v164 = vpop.f32.mrf.mxu0
    %165 = vdwg.mxu0
    %s166 = scalar_lea.vmem %s2, 16
    %v167 = vld [vmem:[%s166] sm:$0xff]
    %v168 = vld [vmem:[%s166 + $0x8] sm:$0xff]
    %v170 = vsel %vm38, %v152, 0
    %v173 = vsel %vm38, %v155, 0
    %v176 = vsel %vm38, %v160, 0
    %v179 = vsel %vm38, %v163, 0
    %181 = vmatprep.subr.mxu0 0.0
    %182 = vmatpush1.msra.mxu0 0.0
    %183 = vmatprep.subr.mxu0 0.0
    %184 = vmatpush1.msra.mxu0 0.0
    %185 = vmatprep.subr.mxu0 0.0
    %186 = vmatpush1.msra.mxu0 0.0
    %187 = vmatprep.subr.mxu0 0.0
    %188 = vmatpush1.msra.mxu0 0.0
    %189 = vmatprep.subr.mxu0 0.0
    %190 = vmatpush1.msra.mxu0 0.0
    %191 = vmatprep.subr.mxu0 0.0
    %192 = vmatpush1.msra.mxu0 0.0
    %193 = vmatprep.subr.mxu0 0.0
    %194 = vmatpush1.msra.mxu0 0.0
    %195 = vmatprep.subr.mxu0 0.0
    %196 = vmatpush1.msra.mxu0 0.0
    %197 = vmatprep.subr.mxu0 0.0
    %198 = vmatpush1.msra.mxu0 0.0
    %199 = vmatprep.subr.mxu0 0.0
    %200 = vmatpush1.msra.mxu0 0.0
    %201 = vmatprep.subr.mxu0 0.0
    %202 = vmatpush1.msra.mxu0 0.0
    %203 = vmatprep.subr.mxu0 0.0
    %204 = vmatpush1.msra.mxu0 0.0
    %205 = vmatprep.subr.mxu0 0.0
    %206 = vmatpush1.msra.mxu0 0.0
    %207 = vmatprep.subr.mxu0 0.0
    %208 = vmatpush1.msra.mxu0 0.0
    %209 = vmatprep.subr.mxu0 0.0
    %210 = vmatpush1.msra.mxu0 %v168
    %211 = vmatprep.subr.mxu0 0.0
    %212 = vmatpush1.msra.mxu0 %v167
    %213 = vmatprep.subr.mxu0 0.0
    %214 = vmatpush2.msra.mxu0 0.0
    %215 = vmatprep.subr.mxu0 0.0
    %216 = vmatpush2.msra.mxu0 0.0
    %217 = vmatprep.subr.mxu0 0.0
    %218 = vmatpush2.msra.mxu0 0.0
    %219 = vmatprep.subr.mxu0 0.0
    %220 = vmatpush2.msra.mxu0 0.0
    %221 = vmatprep.subr.mxu0 0.0
    %222 = vmatpush2.msra.mxu0 0.0
    %223 = vmatprep.subr.mxu0 0.0
    %224 = vmatpush2.msra.mxu0 0.0
    %225 = vmatprep.subr.mxu0 0.0
    %226 = vmatpush2.msra.mxu0 0.0
    %227 = vmatprep.subr.mxu0 0.0
    %228 = vmatpush2.msra.mxu0 0.0
    %229 = vmatprep.subr.mxu0 0.0
    %230 = vmatpush2.msra.mxu0 0.0
    %231 = vmatprep.subr.mxu0 0.0
    %232 = vmatpush2.msra.mxu0 0.0
    %233 = vmatprep.subr.mxu0 0.0
    %234 = vmatpush2.msra.mxu0 0.0
    %235 = vmatprep.subr.mxu0 0.0
    %236 = vmatpush2.msra.mxu0 0.0
    %237 = vmatprep.subr.mxu0 0.0
    %238 = vmatpush2.msra.mxu0 0.0
    %239 = vmatprep.subr.mxu0 0.0
    %240 = vmatpush2.msra.mxu0 0.0
    %241 = vmatprep.subr.mxu0 0.0
    %242 = vmatpush2.msra.mxu0 0.0
    %243 = vmatprep.subr.mxu0 0.0
    %244 = vmatpush2.msra.mxu0 0.0
    %245 = vmatprep.mubr.f32.mxu0 0.0
    %246 = vmatmul.mubr.f32.gmra.mxu0 %v170
    %v247 = vpop.f32.mrf.mxu0
    %v248 = vadd.f32 0.0, %v247
    %v249 = vpop.f32.mrf.mxu0
    %250 = vmatprep.mubr.f32.mxu0 0.0
    %251 = vmatmul.mubr.f32.gmra.mxu0 %v173
    %v252 = vpop.f32.mrf.mxu0
    %v253 = vadd.f32 0.0, %v252
    %v254 = vpop.f32.mrf.mxu0
    %255 = vmatprep.mubr.f32.mxu0 0.0
    %256 = vmatmul.mubr.f32.gmra.mxu0 %v176
    %v257 = vpop.f32.mrf.mxu0
    %v258 = vadd.f32 0.0, %v257
    %v259 = vpop.f32.mrf.mxu0
    %260 = vmatprep.mubr.f32.mxu0 0.0
    %261 = vmatmul.mubr.f32.gmra.mxu0 %v179
    %v262 = vpop.f32.mrf.mxu0
    %v263 = vadd.f32 0.0, %v262
    %v264 = vpop.f32.mrf.mxu0
    %265 = vdwg.mxu0
    %v267 = vsel %vm38, %v80, 0
    %v270 = vsel %vm38, %v83, 0
    %v273 = vsel %vm38, %v88, 0
    %v276 = vsel %vm38, %v91, 0
    %278 = vmatprep.subr.mxu0 0.0
    %279 = vmatpush1.msra.mxu0 0.0
    %280 = vmatprep.subr.mxu0 0.0
    %281 = vmatpush1.msra.mxu0 0.0
    %282 = vmatprep.subr.mxu0 0.0
    %283 = vmatpush1.msra.mxu0 0.0
    %284 = vmatprep.subr.mxu0 0.0
    %285 = vmatpush1.msra.mxu0 0.0
    %286 = vmatprep.subr.mxu0 0.0
    %287 = vmatpush1.msra.mxu0 0.0
    %288 = vmatprep.subr.mxu0 0.0
    %289 = vmatpush1.msra.mxu0 0.0
    %290 = vmatprep.subr.mxu0 0.0
    %291 = vmatpush1.msra.mxu0 0.0
    %292 = vmatprep.subr.mxu0 0.0
    %293 = vmatpush1.msra.mxu0 0.0
    %294 = vmatprep.subr.mxu0 0.0
    %295 = vmatpush1.msra.mxu0 0.0
    %296 = vmatprep.subr.mxu0 0.0
    %297 = vmatpush1.msra.mxu0 0.0
    %298 = vmatprep.subr.mxu0 0.0
    %299 = vmatpush1.msra.mxu0 0.0
    %300 = vmatprep.subr.mxu0 0.0
    %301 = vmatpush1.msra.mxu0 0.0
    %302 = vmatprep.subr.mxu0 0.0
    %303 = vmatpush1.msra.mxu0 0.0
    %304 = vmatprep.subr.mxu0 0.0
    %305 = vmatpush1.msra.mxu0 0.0
    %306 = vmatprep.subr.mxu0 0.0
    %307 = vmatpush1.msra.mxu0 %v95
    %308 = vmatprep.subr.mxu0 0.0
    %309 = vmatpush1.msra.mxu0 %v94
    %310 = vmatprep.subr.mxu0 0.0
    %311 = vmatpush2.msra.mxu0 0.0
    %312 = vmatprep.subr.mxu0 0.0
    %313 = vmatpush2.msra.mxu0 0.0
    %314 = vmatprep.subr.mxu0 0.0
    %315 = vmatpush2.msra.mxu0 0.0
    %316 = vmatprep.subr.mxu0 0.0
    %317 = vmatpush2.msra.mxu0 0.0
    %318 = vmatprep.subr.mxu0 0.0
    %319 = vmatpush2.msra.mxu0 0.0
    %320 = vmatprep.subr.mxu0 0.0
    %321 = vmatpush2.msra.mxu0 0.0
    %322 = vmatprep.subr.mxu0 0.0
    %323 = vmatpush2.msra.mxu0 0.0
    %324 = vmatprep.subr.mxu0 0.0
    %325 = vmatpush2.msra.mxu0 0.0
    %326 = vmatprep.subr.mxu0 0.0
    %327 = vmatpush2.msra.mxu0 0.0
    %328 = vmatprep.subr.mxu0 0.0
    %329 = vmatpush2.msra.mxu0 0.0
    %330 = vmatprep.subr.mxu0 0.0
    %331 = vmatpush2.msra.mxu0 0.0
    %332 = vmatprep.subr.mxu0 0.0
    %333 = vmatpush2.msra.mxu0 0.0
    %334 = vmatprep.subr.mxu0 0.0
    %335 = vmatpush2.msra.mxu0 0.0
    %336 = vmatprep.subr.mxu0 0.0
    %337 = vmatpush2.msra.mxu0 0.0
    %338 = vmatprep.subr.mxu0 0.0
    %339 = vmatpush2.msra.mxu0 0.0
    %340 = vmatprep.subr.mxu0 0.0
    %341 = vmatpush2.msra.mxu0 0.0
    %342 = vmatprep.mubr.f32.mxu0 0.0
    %343 = vmatmul.mubr.f32.gmra.mxu0 %v267
    %v344 = vpop.f32.mrf.mxu0
    %v345 = vadd.f32 %v248, %v344
    %v346 = vpop.f32.mrf.mxu0
    %347 = vmatprep.mubr.f32.mxu0 0.0
    %348 = vmatmul.mubr.f32.gmra.mxu0 %v270
    %v349 = vpop.f32.mrf.mxu0
    %v350 = vadd.f32 %v253, %v349
    %v351 = vpop.f32.mrf.mxu0
    %352 = vmatprep.mubr.f32.mxu0 0.0
    %353 = vmatmul.mubr.f32.gmra.mxu0 %v273
    %v354 = vpop.f32.mrf.mxu0
    %v355 = vadd.f32 %v258, %v354
    %v356 = vpop.f32.mrf.mxu0
    %357 = vmatprep.mubr.f32.mxu0 0.0
    %358 = vmatmul.mubr.f32.gmra.mxu0 %v276
    %v359 = vpop.f32.mrf.mxu0
    %v360 = vadd.f32 %v263, %v359
    %v361 = vpop.f32.mrf.mxu0
    %362 = vdwg.mxu0
    %s363 = scalar_lea.vmem %s0, 32
    %v364 = vld [vmem:[%s363] sm:$0xf]
    %v365 = vld [vmem:[%s363 + $0x4] sm:$0xf]
    %v366 = vld [vmem:[%s363 + $0x8] sm:$0xf]
    %v367 = vld [vmem:[%s363 + $0xc] sm:$0xf]
    %v372 = vunpack.c.l.b16 %v364
    %v373 = vunpack.c.l.b16 %v365
    %v374 = vunpack.c.l.b16 %v366
    %v375 = vunpack.c.l.b16 %v367
    %v376 = vpack.c.b16 %v373, %v372
    %v377 = vpack.c.b16 %v375, %v374
    %v379 = vsel %vm38, %v376, 0
    %v382 = vsel %vm38, %v377, 0
    %384 = vmatprep.subr.bf16.mxu0 0
    %385 = vmatpush1.bf16.msra.mxu0 0
    %386 = vmatprep.subr.bf16.mxu0 0
    %387 = vmatpush1.bf16.msra.mxu0 0
    %388 = vmatprep.subr.bf16.mxu0 0
    %389 = vmatpush1.bf16.msra.mxu0 0
    %390 = vmatprep.subr.bf16.mxu0 0
    %391 = vmatpush1.bf16.msra.mxu0 0
    %392 = vmatprep.subr.bf16.mxu0 0
    %393 = vmatpush1.bf16.msra.mxu0 0
    %394 = vmatprep.subr.bf16.mxu0 0
    %395 = vmatpush1.bf16.msra.mxu0 0
    %396 = vmatprep.subr.bf16.mxu0 0
    %397 = vmatpush1.bf16.msra.mxu0 0
    %398 = vmatprep.subr.bf16.mxu0 0
    %399 = vmatpush1.bf16.msra.mxu0 %v36
    %400 = vmatprep.subr.bf16.mxu0 0
    %401 = vmatpush2.bf16.msra.mxu0 0
    %402 = vmatprep.subr.bf16.mxu0 0
    %403 = vmatpush2.bf16.msra.mxu0 0
    %404 = vmatprep.subr.bf16.mxu0 0
    %405 = vmatpush2.bf16.msra.mxu0 0
    %406 = vmatprep.subr.bf16.mxu0 0
    %407 = vmatpush2.bf16.msra.mxu0 0
    %408 = vmatprep.subr.bf16.mxu0 0
    %409 = vmatpush2.bf16.msra.mxu0 0
    %410 = vmatprep.subr.bf16.mxu0 0
    %411 = vmatpush2.bf16.msra.mxu0 0
    %412 = vmatprep.subr.bf16.mxu0 0
    %413 = vmatpush2.bf16.msra.mxu0 0
    %414 = vmatprep.subr.bf16.mxu0 0
    %415 = vmatpush2.bf16.msra.mxu0 0
    %416 = vmatprep.mubr.bf16.mxu0 0
    %417 = vmatmul.mubr.bf16.gmra.mxu0 %v379
    %v418 = vpop.f32.mrf.mxu0
    %v419 = vadd.f32 0.0, %v418
    %v420 = vpop.f32.mrf.mxu0
    %v421 = vpop.f32.mrf.mxu0
    %v422 = vadd.f32 0.0, %v421
    %v423 = vpop.f32.mrf.mxu0
    %424 = vmatprep.mubr.bf16.mxu0 0
    %425 = vmatmul.mubr.bf16.gmra.mxu0 %v382
    %v426 = vpop.f32.mrf.mxu0
    %v427 = vadd.f32 0.0, %v426
    %v428 = vpop.f32.mrf.mxu0
    %v429 = vpop.f32.mrf.mxu0
    %v430 = vadd.f32 0.0, %v429
    %v431 = vpop.f32.mrf.mxu0
    %432 = vdwg.mxu0
    %s433 = scalar_lea.vmem %s2, 32
    %v434 = vld [vmem:[%s433] sm:$0xff]
    %v435 = vld [vmem:[%s433 + $0x8] sm:$0xff]
    %v437 = vsel %vm38, %v419, 0
    %v440 = vsel %vm38, %v422, 0
    %v443 = vsel %vm38, %v427, 0
    %v446 = vsel %vm38, %v430, 0
    %448 = vmatprep.subr.mxu0 0.0
    %449 = vmatpush1.msra.mxu0 0.0
    %450 = vmatprep.subr.mxu0 0.0
    %451 = vmatpush1.msra.mxu0 0.0
    %452 = vmatprep.subr.mxu0 0.0
    %453 = vmatpush1.msra.mxu0 0.0
    %454 = vmatprep.subr.mxu0 0.0
    %455 = vmatpush1.msra.mxu0 0.0
    %456 = vmatprep.subr.mxu0 0.0
    %457 = vmatpush1.msra.mxu0 0.0
    %458 = vmatprep.subr.mxu0 0.0
    %459 = vmatpush1.msra.mxu0 0.0
    %460 = vmatprep.subr.mxu0 0.0
    %461 = vmatpush1.msra.mxu0 0.0
    %462 = vmatprep.subr.mxu0 0.0
    %463 = vmatpush1.msra.mxu0 0.0
    %464 = vmatprep.subr.mxu0 0.0
    %465 = vmatpush1.msra.mxu0 0.0
    %466 = vmatprep.subr.mxu0 0.0
    %467 = vmatpush1.msra.mxu0 0.0
    %468 = vmatprep.subr.mxu0 0.0
    %469 = vmatpush1.msra.mxu0 0.0
    %470 = vmatprep.subr.mxu0 0.0
    %471 = vmatpush1.msra.mxu0 0.0
    %472 = vmatprep.subr.mxu0 0.0
    %473 = vmatpush1.msra.mxu0 0.0
    %474 = vmatprep.subr.mxu0 0.0
    %475 = vmatpush1.msra.mxu0 0.0
    %476 = vmatprep.subr.mxu0 0.0
    %477 = vmatpush1.msra.mxu0 %v435
    %478 = vmatprep.subr.mxu0 0.0
    %479 = vmatpush1.msra.mxu0 %v434
    %480 = vmatprep.subr.mxu0 0.0
    %481 = vmatpush2.msra.mxu0 0.0
    %482 = vmatprep.subr.mxu0 0.0
    %483 = vmatpush2.msra.mxu0 0.0
    %484 = vmatprep.subr.mxu0 0.0
    %485 = vmatpush2.msra.mxu0 0.0
    %486 = vmatprep.subr.mxu0 0.0
    %487 = vmatpush2.msra.mxu0 0.0
    %488 = vmatprep.subr.mxu0 0.0
    %489 = vmatpush2.msra.mxu0 0.0
    %490 = vmatprep.subr.mxu0 0.0
    %491 = vmatpush2.msra.mxu0 0.0
    %492 = vmatprep.subr.mxu0 0.0
    %493 = vmatpush2.msra.mxu0 0.0
    %494 = vmatprep.subr.mxu0 0.0
    %495 = vmatpush2.msra.mxu0 0.0
    %496 = vmatprep.subr.mxu0 0.0
    %497 = vmatpush2.msra.mxu0 0.0
    %498 = vmatprep.subr.mxu0 0.0
    %499 = vmatpush2.msra.mxu0 0.0
    %500 = vmatprep.subr.mxu0 0.0
    %501 = vmatpush2.msra.mxu0 0.0
    %502 = vmatprep.subr.mxu0 0.0
    %503 = vmatpush2.msra.mxu0 0.0
    %504 = vmatprep.subr.mxu0 0.0
    %505 = vmatpush2.msra.mxu0 0.0
    %506 = vmatprep.subr.mxu0 0.0
    %507 = vmatpush2.msra.mxu0 0.0
    %508 = vmatprep.subr.mxu0 0.0
    %509 = vmatpush2.msra.mxu0 0.0
    %510 = vmatprep.subr.mxu0 0.0
    %511 = vmatpush2.msra.mxu0 0.0
    %512 = vmatprep.mubr.f32.mxu0 0.0
    %513 = vmatmul.mubr.f32.gmra.mxu0 %v437
    %v514 = vpop.f32.mrf.mxu0
    %v515 = vadd.f32 0.0, %v514
    %v516 = vpop.f32.mrf.mxu0
    %517 = vmatprep.mubr.f32.mxu0 0.0
    %518 = vmatmul.mubr.f32.gmra.mxu0 %v440
    %v519 = vpop.f32.mrf.mxu0
    %v520 = vadd.f32 0.0, %v519
    %v521 = vpop.f32.mrf.mxu0
    %522 = vmatprep.mubr.f32.mxu0 0.0
    %523 = vmatmul.mubr.f32.gmra.mxu0 %v443
    %v524 = vpop.f32.mrf.mxu0
    %v525 = vadd.f32 0.0, %v524
    %v526 = vpop.f32.mrf.mxu0
    %527 = vmatprep.mubr.f32.mxu0 0.0
    %528 = vmatmul.mubr.f32.gmra.mxu0 %v446
    %v529 = vpop.f32.mrf.mxu0
    %v530 = vadd.f32 0.0, %v529
    %v531 = vpop.f32.mrf.mxu0
    %532 = vdwg.mxu0
    %v533 = vadd.f32 %v345, %v515
    %v534 = vadd.f32 %v350, %v520
    %v535 = vadd.f32 %v355, %v525
    %v536 = vadd.f32 %v360, %v530
    %s537 = scalar_lea.vmem %s0, 48
    %v538 = vld [vmem:[%s537] sm:$0xf]
    %v539 = vld [vmem:[%s537 + $0x4] sm:$0xf]
    %v540 = vld [vmem:[%s537 + $0x8] sm:$0xf]
    %v541 = vld [vmem:[%s537 + $0xc] sm:$0xf]
    %v546 = vunpack.c.l.b16 %v538
    %v547 = vunpack.c.l.b16 %v539
    %v548 = vunpack.c.l.b16 %v540
    %v549 = vunpack.c.l.b16 %v541
    %v550 = vpack.c.b16 %v547, %v546
    %v551 = vpack.c.b16 %v549, %v548
    %v553 = vsel %vm38, %v550, 0
    %v556 = vsel %vm38, %v551, 0
    %558 = vmatprep.subr.bf16.mxu0 0
    %559 = vmatpush1.bf16.msra.mxu0 0
    %560 = vmatprep.subr.bf16.mxu0 0
    %561 = vmatpush1.bf16.msra.mxu0 0
    %562 = vmatprep.subr.bf16.mxu0 0
    %563 = vmatpush1.bf16.msra.mxu0 0
    %564 = vmatprep.subr.bf16.mxu0 0
    %565 = vmatpush1.bf16.msra.mxu0 0
    %566 = vmatprep.subr.bf16.mxu0 0
    %567 = vmatpush1.bf16.msra.mxu0 0
    %568 = vmatprep.subr.bf16.mxu0 0
    %569 = vmatpush1.bf16.msra.mxu0 0
    %570 = vmatprep.subr.bf16.mxu0 0
    %571 = vmatpush1.bf16.msra.mxu0 0
    %572 = vmatprep.subr.bf16.mxu0 0
    %573 = vmatpush1.bf16.msra.mxu0 %v36
    %574 = vmatprep.subr.bf16.mxu0 0
    %575 = vmatpush2.bf16.msra.mxu0 0
    %576 = vmatprep.subr.bf16.mxu0 0
    %577 = vmatpush2.bf16.msra.mxu0 0
    %578 = vmatprep.subr.bf16.mxu0 0
    %579 = vmatpush2.bf16.msra.mxu0 0
    %580 = vmatprep.subr.bf16.mxu0 0
    %581 = vmatpush2.bf16.msra.mxu0 0
    %582 = vmatprep.subr.bf16.mxu0 0
    %583 = vmatpush2.bf16.msra.mxu0 0
    %584 = vmatprep.subr.bf16.mxu0 0
    %585 = vmatpush2.bf16.msra.mxu0 0
    %586 = vmatprep.subr.bf16.mxu0 0
    %587 = vmatpush2.bf16.msra.mxu0 0
    %588 = vmatprep.subr.bf16.mxu0 0
    %589 = vmatpush2.bf16.msra.mxu0 0
    %590 = vmatprep.mubr.bf16.mxu0 0
    %591 = vmatmul.mubr.bf16.gmra.mxu0 %v553
    %v592 = vpop.f32.mrf.mxu0
    %v593 = vadd.f32 0.0, %v592
    %v594 = vpop.f32.mrf.mxu0
    %v595 = vpop.f32.mrf.mxu0
    %v596 = vadd.f32 0.0, %v595
    %v597 = vpop.f32.mrf.mxu0
    %598 = vmatprep.mubr.bf16.mxu0 0
    %599 = vmatmul.mubr.bf16.gmra.mxu0 %v556
    %v600 = vpop.f32.mrf.mxu0
    %v601 = vadd.f32 0.0, %v600
    %v602 = vpop.f32.mrf.mxu0
    %v603 = vpop.f32.mrf.mxu0
    %v604 = vadd.f32 0.0, %v603
    %v605 = vpop.f32.mrf.mxu0
    %606 = vdwg.mxu0
    %s607 = scalar_lea.vmem %s2, 48
    %v608 = vld [vmem:[%s607] sm:$0xff]
    %v609 = vld [vmem:[%s607 + $0x8] sm:$0xff]
    %v611 = vsel %vm38, %v593, 0
    %v614 = vsel %vm38, %v596, 0
    %v617 = vsel %vm38, %v601, 0
    %v620 = vsel %vm38, %v604, 0
    %622 = vmatprep.subr.mxu0 0.0
    %623 = vmatpush1.msra.mxu0 0.0
    %624 = vmatprep.subr.mxu0 0.0
    %625 = vmatpush1.msra.mxu0 0.0
    %626 = vmatprep.subr.mxu0 0.0
    %627 = vmatpush1.msra.mxu0 0.0
    %628 = vmatprep.subr.mxu0 0.0
    %629 = vmatpush1.msra.mxu0 0.0
    %630 = vmatprep.subr.mxu0 0.0
    %631 = vmatpush1.msra.mxu0 0.0
    %632 = vmatprep.subr.mxu0 0.0
    %633 = vmatpush1.msra.mxu0 0.0
    %634 = vmatprep.subr.mxu0 0.0
    %635 = vmatpush1.msra.mxu0 0.0
    %636 = vmatprep.subr.mxu0 0.0
    %637 = vmatpush1.msra.mxu0 0.0
    %638 = vmatprep.subr.mxu0 0.0
    %639 = vmatpush1.msra.mxu0 0.0
    %640 = vmatprep.subr.mxu0 0.0
    %641 = vmatpush1.msra.mxu0 0.0
    %642 = vmatprep.subr.mxu0 0.0
    %643 = vmatpush1.msra.mxu0 0.0
    %644 = vmatprep.subr.mxu0 0.0
    %645 = vmatpush1.msra.mxu0 0.0
    %646 = vmatprep.subr.mxu0 0.0
    %647 = vmatpush1.msra.mxu0 0.0
    %648 = vmatprep.subr.mxu0 0.0
    %649 = vmatpush1.msra.mxu0 0.0
    %650 = vmatprep.subr.mxu0 0.0
    %651 = vmatpush1.msra.mxu0 %v609
    %652 = vmatprep.subr.mxu0 0.0
    %653 = vmatpush1.msra.mxu0 %v608
    %654 = vmatprep.subr.mxu0 0.0
    %655 = vmatpush2.msra.mxu0 0.0
    %656 = vmatprep.subr.mxu0 0.0
    %657 = vmatpush2.msra.mxu0 0.0
    %658 = vmatprep.subr.mxu0 0.0
    %659 = vmatpush2.msra.mxu0 0.0
    %660 = vmatprep.subr.mxu0 0.0
    %661 = vmatpush2.msra.mxu0 0.0
    %662 = vmatprep.subr.mxu0 0.0
    %663 = vmatpush2.msra.mxu0 0.0
    %664 = vmatprep.subr.mxu0 0.0
    %665 = vmatpush2.msra.mxu0 0.0
    %666 = vmatprep.subr.mxu0 0.0
    %667 = vmatpush2.msra.mxu0 0.0
    %668 = vmatprep.subr.mxu0 0.0
    %669 = vmatpush2.msra.mxu0 0.0
    %670 = vmatprep.subr.mxu0 0.0
    %671 = vmatpush2.msra.mxu0 0.0
    %672 = vmatprep.subr.mxu0 0.0
    %673 = vmatpush2.msra.mxu0 0.0
    %674 = vmatprep.subr.mxu0 0.0
    %675 = vmatpush2.msra.mxu0 0.0
    %676 = vmatprep.subr.mxu0 0.0
    %677 = vmatpush2.msra.mxu0 0.0
    %678 = vmatprep.subr.mxu0 0.0
    %679 = vmatpush2.msra.mxu0 0.0
    %680 = vmatprep.subr.mxu0 0.0
    %681 = vmatpush2.msra.mxu0 0.0
    %682 = vmatprep.subr.mxu0 0.0
    %683 = vmatpush2.msra.mxu0 0.0
    %684 = vmatprep.subr.mxu0 0.0
    %685 = vmatpush2.msra.mxu0 0.0
    %686 = vmatprep.mubr.f32.mxu0 0.0
    %687 = vmatmul.mubr.f32.gmra.mxu0 %v611
    %v688 = vpop.f32.mrf.mxu0
    %v689 = vadd.f32 0.0, %v688
    %v690 = vpop.f32.mrf.mxu0
    %691 = vmatprep.mubr.f32.mxu0 0.0
    %692 = vmatmul.mubr.f32.gmra.mxu0 %v614
    %v693 = vpop.f32.mrf.mxu0
    %v694 = vadd.f32 0.0, %v693
    %v695 = vpop.f32.mrf.mxu0
    %696 = vmatprep.mubr.f32.mxu0 0.0
    %697 = vmatmul.mubr.f32.gmra.mxu0 %v617
    %v698 = vpop.f32.mrf.mxu0
    %v699 = vadd.f32 0.0, %v698
    %v700 = vpop.f32.mrf.mxu0
    %701 = vmatprep.mubr.f32.mxu0 0.0
    %702 = vmatmul.mubr.f32.gmra.mxu0 %v620
    %v703 = vpop.f32.mrf.mxu0
    %v704 = vadd.f32 0.0, %v703
    %v705 = vpop.f32.mrf.mxu0
    %706 = vdwg.mxu0
    %v707 = vadd.f32 %v533, %v689
    %v708 = vadd.f32 %v534, %v694
    %v709 = vadd.f32 %v535, %v699
    %v710 = vadd.f32 %v536, %v704
    %vm711 = vcmask 261120
    %712 = vst.msk [vmem:[#allocation2] sm:$0xff] %vm711, %v707
    %713 = vst.msk [vmem:[#allocation2 + $0x8] sm:$0xff] %vm711, %v708
    %714 = vst.msk [vmem:[#allocation2 + $0x10] sm:$0xff] %vm711, %v709
    %715 = vst.msk [vmem:[#allocation2 + $0x18] sm:$0xff] %vm711, %v710
    // Predicated region
    $region14: #{tpu_custom_call.1} parent=1 // pred_check
      _
    $region15: #{tpu_custom_call.1} parent=1 // pred_check_branch
      %717 = sbr.rel (0) target = $region17
    $region16: #{tpu_custom_call.1} parent=1 // pred_region
      %s719 = ssub.s32 512, 512
      %720 = vsyncadd [#allocation3], %s719
      %s721 = sshll.u32 [#allocation2], 4
      %s722 = int_to_ptr.vmem [resolvable:$true] %s721
      %727 = dma.vmem_to_hbm [thread:$0]  %s722, 512, %s3, [#allocation3], 128, 128, 8
    $region17: #{tpu_custom_call.1} parent=1 // pred_fallthru
      _
    // Predicated region
    $region18: #{tpu_custom_call.1} parent=1 // pred_check
      _
    $region19: #{tpu_custom_call.1} parent=1 // pred_check_branch
      %729 = sbr.rel (0) target = $region21
    $region20: #{tpu_custom_call.1} parent=1 // pred_region
      %730 = dma.done [#allocation3], 512
    $region21: #{tpu_custom_call.1} parent=1 // pred_fallthru
      _
    %731 = vsyncpa [#allocation3], 1

</llo_original>
